<compile_context>
chip_gen: v7x
topology: tpu7x:2x2x1
jax: 0.10.0
libtpu: 0.0.40
codegen_flags: <defaults>
</compile_context>

<pallas_src>
import jax
import jax.numpy as jnp
from jax.experimental import pallas as pl
from jax.experimental.pallas import tpu as pltpu


def mydense_kernel(w_ref, x_ref, o_ref):
    # w_ref: (4, 1) folded weight column (VMEM-resident, constant block index).
    # x_ref: (4, TB) lane-dense batch tile of x^T.
    # o_ref: (1, TB) lane-dense output tile.
    # Broadcast-multiply on the VPU, 4-deep sublane reduce on the XLU.
    o_ref[...] = jnp.sum(x_ref[...] * w_ref[...], axis=0, keepdims=True)


def _round_up(n, m):
    return ((n + m - 1) // m) * m


def _choose_lane_tile(batch, max_lanes):
    bp = _round_up(batch, 128)
    if bp <= 128:
        return 128
    # >= 2 grid steps so the "parallel" axis can shard across v7x's 2 TCs,
    # capped so per-step VMEM stays small on every generation.
    return min(max_lanes, _round_up(pl.cdiv(bp, 2), 128))


def mydense_forward(x, params, *, max_lanes=65536):
    """x: (B, 4); params: [W0 (4,4), W1 (4,4), W2 (4,4), W3 (4,1)].

    Returns x @ W0 @ W1 @ W2 @ W3, shape (B, 1), float32.
    """
    assert max_lanes % 128 == 0, "max_lanes must be a multiple of 128"
    B, K = x.shape
    x = x.astype(jnp.float32)

    # Fold the static weight chain offline (wrapper-side XLA, ~100 FLOPs).
    w = params[0].astype(jnp.float32)
    for p in params[1:]:
        w = w @ p.astype(jnp.float32)          # -> (K, 1)

    tb = _choose_lane_tile(B, max_lanes)       # lane tile, multiple of 128
    bp = _round_up(B, tb)

    # Single relayout copy: transpose so batch is the lane axis, folding the
    # (small) tail padding into the same copy instead of a second pad pass.
    if bp == B:
        xt = x.T
    else:
        xt = jnp.zeros((K, bp), jnp.float32).at[:, :B].set(x.T)

    grid = (bp // tb,)
    out = pl.pallas_call(
        mydense_kernel,
        out_shape=jax.ShapeDtypeStruct((1, bp), jnp.float32),
        grid=grid,
        in_specs=[
            pl.BlockSpec((K, 1), lambda i: (0, 0)),    # folded weight, resident
            pl.BlockSpec((K, tb), lambda i: (0, i)),   # lane-dense batch tile
        ],
        out_specs=pl.BlockSpec((1, tb), lambda i: (0, i)),
        compiler_params=pltpu.CompilerParams(
            dimension_semantics=("parallel",),
        ),
    )(w, xt)

    return out[0, :B].reshape(B, 1)


def init_params(key):
    """Deterministic stand-in for torch.randn parameters of MyDense."""
    k0, k1, k2, k3 = jax.random.split(key, 4)
    return [
        jax.random.normal(k0, (4, 4), dtype=jnp.float32),
        jax.random.normal(k1, (4, 4), dtype=jnp.float32),
        jax.random.normal(k2, (4, 4), dtype=jnp.float32),
        jax.random.normal(k3, (4, 1), dtype=jnp.float32),
    ]


def _reference(x, params):
    ref = x.astype(jnp.float32)
    for w in params:
        ref = ref @ w
    return ref


if __name__ == "__main__":
    key = jax.random.PRNGKey(0)
    kx, kx2, kp = jax.random.split(key, 3)
    params = init_params(kp)

    # Module-native size: (batch=2, features=4).
    x = jax.random.normal(kx, (2, 4), dtype=jnp.float32)
    out = jax.block_until_ready(mydense_forward(x, params))
    ref = _reference(x, params)
    assert out.shape == (2, 1), out.shape
    assert jnp.allclose(out, ref, rtol=1e-4, atol=1e-3), (out, ref)

    # Larger, non-tile-multiple batch: exercises tail padding + 2-step grid.
    x2 = jax.random.normal(kx2, (3000, 4), dtype=jnp.float32)
    out2 = jax.block_until_ready(mydense_forward(x2, params))
    ref2 = _reference(x2, params)
    assert out2.shape == (3000, 1), out2.shape
    assert jnp.allclose(out2, ref2, rtol=1e-4, atol=1e-3)

    print("KERNEL_OK")
</pallas_src>

<mosaic_0001>
module attributes {stable_mosaic.version = 11 : i64} {
  func.func @mydense_kernel(%arg0: i32, %arg1: memref<4x1xf32, #tpu.memory_space<vmem>>, %arg2: memref<4x128xf32, #tpu.memory_space<vmem>>, %arg3: memref<1x128xf32, #tpu.memory_space<vmem>>) attributes {dimension_semantics = [#tpu.dimension_semantics<parallel>], iteration_bounds = array<i64: 1>, scalar_prefetch = 0 : i64, scratch_operands = 0 : i64, tpu.core_type = #tpu.core_type<tc>, window_params = [{pipeline_mode = #tpu.pipeline_mode<synchronous>, transform_indices = @transform_0, window_bounds = array<i64: 4, 1>}, {transform_indices = @transform_1, window_bounds = array<i64: 4, 128>}, {transform_indices = @transform_2, window_bounds = array<i64: 1, 128>}]} {
    %c0 = arith.constant 0 : index
    %c0_0 = arith.constant 0 : index
    %0 = vector.load %arg2[%c0, %c0_0] : memref<4x128xf32, #tpu.memory_space<vmem>>, vector<4x128xf32>
    %c0_1 = arith.constant 0 : index
    %c0_2 = arith.constant 0 : index
    %1 = vector.load %arg1[%c0_1, %c0_2] : memref<4x1xf32, #tpu.memory_space<vmem>>, vector<4x1xf32>
    %2 = vector.broadcast %1 : vector<4x1xf32> to vector<4x128xf32>
    %3 = arith.mulf %0, %2 : vector<4x128xf32>
    %cst = arith.constant dense<0.000000e+00> : vector<128xf32>
    %4 = vector.multi_reduction <add>, %3, %cst [0] : vector<4x128xf32> to vector<128xf32>
    %5 = vector.shape_cast %4 : vector<128xf32> to vector<1x128xf32>
    %c0_3 = arith.constant 0 : index
    %c0_4 = arith.constant 0 : index
    %6 = vector.load %arg3[%c0_3, %c0_4] : memref<1x128xf32, #tpu.memory_space<vmem>>, vector<1x128xf32>
    tpu.vector_store %arg3[%c0_3, %c0_4], %5 {strides = array<i32>} : memref<1x128xf32, #tpu.memory_space<vmem>>, vector<1x128xf32>,
    return
  }
  func.func @transform_0(%arg0: i32) -> (i32, i32) {
    %c0_i32 = arith.constant 0 : i32
    %c0_i32_0 = arith.constant 0 : i32
    %c0_i32_1 = arith.constant 0 : i32
    return %c0_i32, %c0_i32_0 : i32, i32
  }
  func.func @transform_1(%arg0: i32) -> (i32, i32) {
    %c0_i32 = arith.constant 0 : i32
    %c0_i32_0 = arith.constant 0 : i32
    return %c0_i32, %arg0 : i32, i32
  }
  func.func @transform_2(%arg0: i32) -> (i32, i32) {
    %c0_i32 = arith.constant 0 : i32
    %c0_i32_0 = arith.constant 0 : i32
    return %c0_i32, %arg0 : i32, i32
  }
}

</mosaic_0001>

<llo_original>
// kernel: tpu_custom_call.1
$region0: #{tpu_custom_call.1}
  #allocation0 [shape = 'u32[]', space=smem, size = 0x4, offset = 0x4, fixed_abs, tag = 'smem constant byte address 0x4 - core index']
  #allocation1 [shape = 'u32[144,128]{1,0:T(1,128)}', space=vmem, size = 0x12000, scoped, tag = 'internal scratch']
  %s0 = inlined_call_operand.vmem [shape: f32[4,1], index: 0, kind: input, shape index: {}]
  %s1 = inlined_call_operand.vmem [shape: f32[4,128], index: 1, kind: input, shape index: {}]
  %s2 = inlined_call_operand.hbm [shape: f32[1,128], index: 2, kind: output, shape index: {}]
  %s3 = sld [smem:[#allocation0]]
  $region18: #{tpu_custom_call.1} parent=0
    _
  %s5 = ssub.s32 1, %s3
  %s6 = scalar_select 0, %s5, %s3
  $region1: #{tpu_custom_call.1} parent=0
    #allocation2 [shape = 'u8[512]{0}', space=vmem, size = 0x400, scoped, tag = 'output window, operand 0, single buffered']
    #allocation3 [shape = 's32[1]{0}', space=sflag, size = 0x4, scoped, tag = 'scoped memory for tpu_custom_call.1']
    %7 = vsyncpa [#allocation3], 0
    // Predicated region
    $region2: #{tpu_custom_call.1} parent=1 // pred_check
      _
    $region3: #{tpu_custom_call.1} parent=1 // pred_check_branch
      %9 = sbr.rel (0) target = $region5
    $region4: #{tpu_custom_call.1} parent=1 // pred_region
      _
    $region5: #{tpu_custom_call.1} parent=1 // pred_fallthru
      _
    // Predicated region
    $region6: #{tpu_custom_call.1} parent=1 // pred_check
      _
    $region7: #{tpu_custom_call.1} parent=1 // pred_check_branch
      %11 = sbr.rel (0) target = $region9
    $region8: #{tpu_custom_call.1} parent=1 // pred_region
      _
    $region9: #{tpu_custom_call.1} parent=1 // pred_fallthru
      _
    %v12 = vld [vmem:[%s1] sm:$0xf]
    %v13 = vld [vmem:[%s0] sm:$0xf]
    %15 = vset.pattern.permute.xlu0 0
    %16 = vperm.xlu0 %15, %v13
    %v17 = vpop.permute.xlu0 %16
    %v19 = vmul.f32 %v12, %v17
    %vm20 = vcmask 1043456
    %v21 = vsel %vm20, %v19, 0.0
    %v22 = vrot.slane %v21, 4
    %v23 = vadd.f32 %v21, %v22
    %v24 = vrot.slane %v23, 2
    %v25 = vadd.f32 %v23, %v24
    %v26 = vrot.slane %v25, 1
    %v27 = vadd.f32 %v25, %v26
    %28 = vst [vmem:[#allocation2] sm:$0x1] %v27
    // Predicated region
    $region10: #{tpu_custom_call.1} parent=1 // pred_check
      _
    $region11: #{tpu_custom_call.1} parent=1 // pred_check_branch
      %30 = sbr.rel (0) target = $region13
    $region12: #{tpu_custom_call.1} parent=1 // pred_region
      %s32 = ssub.s32 16, 16
      %33 = vsyncadd [#allocation3], %s32
      %s35 = sshll.u32 [#allocation2], 4
      %s36 = int_to_ptr.vmem [resolvable:$true] %s35
      %38 = dma.vmem_to_hbm [thread:$0]  %s36, 16, %s2, [#allocation3]
    $region13: #{tpu_custom_call.1} parent=1 // pred_fallthru
      _
    // Predicated region
    $region14: #{tpu_custom_call.1} parent=1 // pred_check
      _
    $region15: #{tpu_custom_call.1} parent=1 // pred_check_branch
      %40 = sbr.rel (0) target = $region17
    $region16: #{tpu_custom_call.1} parent=1 // pred_region
      %41 = dma.done [#allocation3], 16
    $region17: #{tpu_custom_call.1} parent=1 // pred_fallthru
      _
    %42 = vsyncpa [#allocation3], 1

</llo_original>
